<compile_context>
chip_gen: v7x
topology: tpu7x:2x2x1
jax: 0.10.0
libtpu: 0.0.40
codegen_flags: <defaults>
</compile_context>

<pallas_src>
import jax
import jax.numpy as jnp
from jax.experimental import pallas as pl
from jax.experimental.pallas import tpu as pltpu


# ------------------------- helpers -------------------------

def _round_up(x, m):
    return ((x + m - 1) // m) * m


def _choose_tiling(B):
    """Pick (tile_m, Mp): tile_m | Mp, Mp >= B, multiples of 8, small waste,
    and >= 2 grid steps whenever there is more than one sublane row of work."""
    Mp_min = _round_up(max(B, 8), 8)
    if Mp_min <= 8:
        return 8, 8
    cap = _round_up(-(-Mp_min // 2), 8)          # <= half the work -> >= 2 steps
    for t in (512, 256, 128, 64, 32, 16, 8):
        if t > cap:
            continue
        mp = _round_up(Mp_min, t)
        if mp - Mp_min <= max(8, Mp_min // 8):   # <= ~12% padded rows
            return t, mp
    return 8, Mp_min                              # unreachable (t=8 always fits)


# ------------------------- Pallas kernel -------------------------

def _make_mlp_kernel(num_layers, out_widths):
    """Fused MLP: h = x; for each layer: h = bf16(h) @ W_l + b_l ; write h.

    out_widths[l] = column count of W_l as stored (only the last is 128-padded).
    """
    def kernel(x_ref, *refs):
        w_refs = refs[:num_layers]
        b_ref = refs[num_layers]          # (L, max_out_pad) f32, all biases
        o_ref = refs[num_layers + 1]

        b_all = b_ref[...]                # tiny, load once
        h = x_ref[...]                    # (tile_m, in) f32
        for l in range(num_layers):       # static unroll over layers
            h = jnp.dot(h.astype(jnp.bfloat16), w_refs[l][...],
                        preferred_element_type=jnp.float32)
            h = h + b_all[l:l + 1, :out_widths[l]]
        o_ref[...] = h.astype(o_ref.dtype)
    return kernel


# ------------------------- one-time parameter prep -------------------------

def prepare_classifier_params(weights, biases, lane=128):
    """Transpose, pad and cast parameters ONCE (hoisted out of the forward).

    weights[l]: [out_l, in_l]  (PyTorch nn.Linear layout),  biases[l]: [out_l].
    """
    num_layers = len(weights)
    dims = [int(weights[0].shape[1])] + [int(w.shape[0]) for w in weights]
    # Only the final output dim is lane-padded (unmasked vst); K / intermediate
    # dims stay full-extent (padding them does not change MXU pass count).
    pdims = list(dims)
    pdims[-1] = _round_up(dims[-1], lane)

    w_pad = []
    for l in range(num_layers):
        w = weights[l].astype(jnp.float32)                      # [out_l, in_l]
        wp = jnp.zeros((pdims[l], pdims[l + 1]), jnp.float32)
        wp = wp.at[:dims[l], :dims[l + 1]].set(w.T)             # [in, out_pad]
        w_pad.append(wp.astype(jnp.bfloat16))                   # bf16 MXU operand

    max_out = max(pdims[1:])
    b_all = jnp.zeros((num_layers, max_out), jnp.float32)
    for l in range(num_layers):
        b_all = b_all.at[l, :dims[l + 1]].set(biases[l].astype(jnp.float32))

    return {"w": tuple(w_pad), "b": b_all,
            "dims": tuple(dims), "pdims": tuple(pdims)}


# ------------------------- forward wrapper -------------------------

def classifier_forward(x, params):
    """x: [B, in_features]  ->  [B, out_features]  (matches Classifier.forward)."""
    w_pad, b_all = params["w"], params["b"]
    dims, pdims = params["dims"], params["pdims"]
    num_layers = len(w_pad)

    B, in_features = x.shape
    assert in_features == dims[0], (in_features, dims[0])
    out_features, out_pad = dims[-1], pdims[-1]

    tile_m, Mp = _choose_tiling(B)
    xp = x.astype(jnp.float32)
    if Mp != B:
        xp = jnp.pad(xp, ((0, Mp - B), (0, 0)))   # only per-call prep: row pad
    grid = (Mp // tile_m,)

    in_specs = [pl.BlockSpec((tile_m, dims[0]), lambda i: (i, 0))]
    for l in range(num_layers):                    # weights: VMEM-resident
        in_specs.append(pl.BlockSpec((pdims[l], pdims[l + 1]), lambda i: (0, 0)))
    in_specs.append(pl.BlockSpec(b_all.shape, lambda i: (0, 0)))   # all biases

    # VMEM need: double-buffered x/out tiles + (double-buffered) weights/bias,
    # plus headroom; clamp well under v7x's 64 MiB per-TC budget.
    need = 2 * tile_m * (dims[0] + out_pad) * 4
    need += 2 * sum(int(w.size) * 2 for w in w_pad) + 2 * int(b_all.size) * 4
    vmem_limit = int(min(max(4 * need + (4 << 20), 16 << 20), 48 << 20))

    out = pl.pallas_call(
        _make_mlp_kernel(num_layers, tuple(pdims[1:])),
        out_shape=jax.ShapeDtypeStruct((Mp, out_pad), jnp.float32),
        grid_spec=pltpu.PrefetchScalarGridSpec(
            num_scalar_prefetch=0,
            grid=grid,
            in_specs=in_specs,
            out_specs=pl.BlockSpec((tile_m, out_pad), lambda i: (i, 0)),
        ),
        compiler_params=pltpu.CompilerParams(
            dimension_semantics=("parallel",),
            vmem_limit_bytes=vmem_limit,
        ),
    )(xp, *w_pad, b_all)

    return out[:B, :out_features]


# ------------------------- reference (pure JAX, f32) -------------------------

def classifier_reference(x, weights, biases):
    h = x.astype(jnp.float32)
    for w, b in zip(weights, biases):
        h = h @ w.astype(jnp.float32).T + b.astype(jnp.float32)
    return h


# ------------------------- main -------------------------

if __name__ == "__main__":
    key = jax.random.PRNGKey(0)

    batch = 8
    in_features = 32
    middle_features = 64
    out_features = 10
    n_hidden_layers = 1  # module default -> 2 Linear layers total

    # Replicate the module's layer-construction logic.
    layer_shapes = []
    is_last_layer = not bool(n_hidden_layers)
    layer_shapes.append((in_features,
                         out_features if is_last_layer else middle_features))
    remaining = n_hidden_layers
    while remaining > 0:
        is_last_layer = remaining <= 1
        layer_shapes.append((middle_features,
                             out_features if is_last_layer else middle_features))
        remaining -= 1

    # Deterministic params matching nn.Linear default init
    # (uniform(-1/sqrt(fan_in), 1/sqrt(fan_in)) for weight and bias).
    weights, biases = [], []
    for fin, fout in layer_shapes:
        key, kw, kb = jax.random.split(key, 3)
        bound = 1.0 / jnp.sqrt(jnp.float32(fin))
        weights.append(jax.random.uniform(kw, (fout, fin), jnp.float32,
                                          minval=-bound, maxval=bound))
        biases.append(jax.random.uniform(kb, (fout,), jnp.float32,
                                         minval=-bound, maxval=bound))

    key, kx = jax.random.split(key)
    x = jax.random.normal(kx, (batch, in_features), dtype=jnp.float32)

    # One-time parameter prep (hoisted out of the forward path), jitted forward.
    params = prepare_classifier_params(weights, biases)
    fwd = jax.jit(lambda xx: classifier_forward(xx, params))

    out = jax.block_until_ready(fwd(x))

    ref = classifier_reference(x, weights, biases)
    assert out.shape == (batch, out_features), out.shape
    # bf16 MXU operands -> loosened tolerance vs the f32 reference.
    max_err = float(jnp.max(jnp.abs(out - ref)))
    assert jnp.allclose(out, ref, atol=3e-2, rtol=3e-2), max_err

    # TODO(synk): the `verbose` print in Classifier.forward is host-side
    # debugging only and has no kernel equivalent.
    print("KERNEL_OK")
</pallas_src>

<mosaic_0001>
module attributes {stable_mosaic.version = 11 : i64} {
  func.func @kernel(%arg0: i32, %arg1: memref<8x32xf32, #tpu.memory_space<vmem>>, %arg2: memref<32x64xbf16, #tpu.memory_space<vmem>>, %arg3: memref<64x128xbf16, #tpu.memory_space<vmem>>, %arg4: memref<2x128xf32, #tpu.memory_space<vmem>>, %arg5: memref<8x128xf32, #tpu.memory_space<vmem>>) attributes {dimension_semantics = [#tpu.dimension_semantics<parallel>], iteration_bounds = array<i64: 1>, scalar_prefetch = 0 : i64, scratch_operands = 0 : i64, tpu.core_type = #tpu.core_type<tc>, window_params = [{transform_indices = @transform_0, window_bounds = array<i64: 8, 32>}, {pipeline_mode = #tpu.pipeline_mode<synchronous>, transform_indices = @transform_1, window_bounds = array<i64: 32, 64>}, {pipeline_mode = #tpu.pipeline_mode<synchronous>, transform_indices = @transform_2, window_bounds = array<i64: 64, 128>}, {pipeline_mode = #tpu.pipeline_mode<synchronous>, transform_indices = @transform_3, window_bounds = array<i64: 2, 128>}, {transform_indices = @transform_4, window_bounds = array<i64: 8, 128>}]} {
    %c0 = arith.constant 0 : index
    %c0_0 = arith.constant 0 : index
    %0 = vector.load %arg4[%c0, %c0_0] : memref<2x128xf32, #tpu.memory_space<vmem>>, vector<2x128xf32>
    %c0_1 = arith.constant 0 : index
    %c0_2 = arith.constant 0 : index
    %1 = vector.load %arg1[%c0_1, %c0_2] : memref<8x32xf32, #tpu.memory_space<vmem>>, vector<8x32xf32>
    %2 = arith.truncf %1 : vector<8x32xf32> to vector<8x32xbf16>
    %c0_3 = arith.constant 0 : index
    %c0_4 = arith.constant 0 : index
    %3 = vector.load %arg2[%c0_3, %c0_4] : memref<32x64xbf16, #tpu.memory_space<vmem>>, vector<32x64xbf16>
    %cst = arith.constant dense<0.000000e+00> : vector<8x64xf32>
    %4 = tpu.matmul %2, %3, %cst {dimension_numbers = #tpu.dot_dimension_numbers<[1], [0], [0], [1], [0, 0, 1, 1], [], []>} : vector<8x32xbf16>, vector<32x64xbf16>, vector<8x64xf32> -> vector<8x64xf32>
    %5 = vector.extract_strided_slice %0 {offsets = [0, 0], sizes = [1, 64], strides = [1, 1]} : vector<2x128xf32> to vector<1x64xf32>
    %6 = vector.broadcast %5 : vector<1x64xf32> to vector<8x64xf32>
    %7 = arith.addf %4, %6 : vector<8x64xf32>
    %8 = arith.truncf %7 : vector<8x64xf32> to vector<8x64xbf16>
    %c0_5 = arith.constant 0 : index
    %c0_6 = arith.constant 0 : index
    %9 = vector.load %arg3[%c0_5, %c0_6] : memref<64x128xbf16, #tpu.memory_space<vmem>>, vector<64x128xbf16>
    %cst_7 = arith.constant dense<0.000000e+00> : vector<8x128xf32>
    %10 = tpu.matmul %8, %9, %cst_7 {dimension_numbers = #tpu.dot_dimension_numbers<[1], [0], [0], [1], [0, 0, 1, 1], [], []>} : vector<8x64xbf16>, vector<64x128xbf16>, vector<8x128xf32> -> vector<8x128xf32>
    %11 = vector.extract_strided_slice %0 {offsets = [1, 0], sizes = [1, 128], strides = [1, 1]} : vector<2x128xf32> to vector<1x128xf32>
    %12 = vector.broadcast %11 : vector<1x128xf32> to vector<8x128xf32>
    %13 = arith.addf %10, %12 : vector<8x128xf32>
    %c0_8 = arith.constant 0 : index
    %c0_9 = arith.constant 0 : index
    %14 = vector.load %arg5[%c0_8, %c0_9] : memref<8x128xf32, #tpu.memory_space<vmem>>, vector<8x128xf32>
    tpu.vector_store %arg5[%c0_8, %c0_9], %13 {strides = array<i32>} : memref<8x128xf32, #tpu.memory_space<vmem>>, vector<8x128xf32>,
    return
  }
  func.func @transform_0(%arg0: i32) -> (i32, i32) {
    %c0_i32 = arith.constant 0 : i32
    %c0_i32_0 = arith.constant 0 : i32
    return %arg0, %c0_i32 : i32, i32
  }
  func.func @transform_1(%arg0: i32) -> (i32, i32) {
    %c0_i32 = arith.constant 0 : i32
    %c0_i32_0 = arith.constant 0 : i32
    %c0_i32_1 = arith.constant 0 : i32
    return %c0_i32, %c0_i32_0 : i32, i32
  }
  func.func @transform_2(%arg0: i32) -> (i32, i32) {
    %c0_i32 = arith.constant 0 : i32
    %c0_i32_0 = arith.constant 0 : i32
    %c0_i32_1 = arith.constant 0 : i32
    return %c0_i32, %c0_i32_0 : i32, i32
  }
  func.func @transform_3(%arg0: i32) -> (i32, i32) {
    %c0_i32 = arith.constant 0 : i32
    %c0_i32_0 = arith.constant 0 : i32
    %c0_i32_1 = arith.constant 0 : i32
    return %c0_i32, %c0_i32_0 : i32, i32
  }
  func.func @transform_4(%arg0: i32) -> (i32, i32) {
    %c0_i32 = arith.constant 0 : i32
    %c0_i32_0 = arith.constant 0 : i32
    return %arg0, %c0_i32 : i32, i32
  }
}

</mosaic_0001>

<llo_original>
// kernel: _lambda_.1
$region0: #{_lambda_.1}
  #allocation0 [shape = 'u32[]', space=smem, size = 0x4, offset = 0x4, fixed_abs, tag = 'smem constant byte address 0x4 - core index']
  #allocation1 [shape = 'u32[144,128]{1,0:T(1,128)}', space=vmem, size = 0x12000, scoped, tag = 'internal scratch']
  %s0 = inlined_call_operand.hbm [shape: f32[8,32], index: 0, kind: input, shape index: {}]
  %s1 = inlined_call_operand.hbm [shape: bf16[32,64], index: 1, kind: input, shape index: {}]
  %s2 = inlined_call_operand.hbm [shape: bf16[64,128], index: 2, kind: input, shape index: {}]
  %s3 = inlined_call_operand.vmem [shape: f32[2,128], index: 3, kind: input, shape index: {}]
  %s4 = inlined_call_operand.hbm [shape: f32[8,128], index: 4, kind: output, shape index: {}]
  %s5 = sld [smem:[#allocation0]]
  $region38: #{_lambda_.1} parent=0
    _
  %s7 = ssub.s32 1, %s5
  %s8 = scalar_select 0, %s7, %s5
  $region1: #{_lambda_.1} parent=0
    #allocation2 [shape = 'u8[4096]{0}', space=vmem, size = 0x1000, scoped, tag = 'input window, operand 0, single buffered']
    #allocation3 [shape = 's32[1]{0}', space=sflag, size = 0x4, scoped, tag = 'scoped memory for _lambda_.1']
    #allocation4 [shape = 's32[1]{0}', space=sflag, size = 0x4, scoped, tag = 'scoped memory for _lambda_.1']
    #allocation5 [shape = 'u8[8192]{0}', space=vmem, size = 0x2000, scoped, tag = 'input window, operand 1, single buffered']
    #allocation6 [shape = 's32[1]{0}', space=sflag, size = 0x4, scoped, tag = 'scoped memory for _lambda_.1']
    #allocation7 [shape = 'u8[16384]{0}', space=vmem, size = 0x4000, scoped, tag = 'input window, operand 2, single buffered']
    #allocation8 [shape = 'u8[4096]{0}', space=vmem, size = 0x1000, scoped, tag = 'output window, operand 0, single buffered']
    %9 = vsyncpa [#allocation3], 0
    %10 = vsyncpa [#allocation6], 0
    %11 = vsyncpa [#allocation4], 0
    // Predicated region
    $region2: #{_lambda_.1} parent=1 // pred_check
      _
    $region3: #{_lambda_.1} parent=1 // pred_check_branch
      %13 = sbr.rel (0) target = $region5
    $region4: #{_lambda_.1} parent=1 // pred_region
      %s15 = ssub.s32 128, 128
      %16 = vsyncadd [#allocation3], %s15
      %s18 = sshll.u32 [#allocation2], 4
      %s19 = int_to_ptr.vmem [resolvable:$true] %s18
      %21 = dma.hbm_to_vmem [thread:$0]  %s0, 128, %s19, [#allocation3]
    $region5: #{_lambda_.1} parent=1 // pred_fallthru
      _
    // Predicated region
    $region6: #{_lambda_.1} parent=1 // pred_check
      _
    $region7: #{_lambda_.1} parent=1 // pred_check_branch
      %23 = sbr.rel (0) target = $region9
    $region8: #{_lambda_.1} parent=1 // pred_region
      %s25 = ssub.s32 256, 256
      %26 = vsyncadd [#allocation6], %s25
      %s27 = sshll.u32 [#allocation5], 4
      %s28 = int_to_ptr.vmem [resolvable:$true] %s27
      %33 = dma.hbm_to_vmem [thread:$0]  %s1, 256, %s28, [#allocation6], 64, 64, 4
    $region9: #{_lambda_.1} parent=1 // pred_fallthru
      _
    // Predicated region
    $region10: #{_lambda_.1} parent=1 // pred_check
      _
    $region11: #{_lambda_.1} parent=1 // pred_check_branch
      %35 = sbr.rel (0) target = $region13
    $region12: #{_lambda_.1} parent=1 // pred_region
      %s37 = ssub.s32 512, 512
      %38 = vsyncadd [#allocation6], %s37
      %s39 = sshll.u32 [#allocation7], 4
      %s40 = int_to_ptr.vmem [resolvable:$true] %s39
      %45 = dma.hbm_to_vmem [thread:$0]  %s2, 512, %s40, [#allocation6], 64, 64, 4
    $region13: #{_lambda_.1} parent=1 // pred_fallthru
      _
    // Predicated region
    $region14: #{_lambda_.1} parent=1 // pred_check
      _
    $region15: #{_lambda_.1} parent=1 // pred_check_branch
      %47 = sbr.rel (0) target = $region17
    $region16: #{_lambda_.1} parent=1 // pred_region
      _
    $region17: #{_lambda_.1} parent=1 // pred_fallthru
      _
    // Predicated region
    $region18: #{_lambda_.1} parent=1 // pred_check
      _
    $region19: #{_lambda_.1} parent=1 // pred_check_branch
      %49 = sbr.rel (0) target = $region21
    $region20: #{_lambda_.1} parent=1 // pred_region
      %50 = dma.done [#allocation3], 128
    $region21: #{_lambda_.1} parent=1 // pred_fallthru
      _
    // Predicated region
    $region22: #{_lambda_.1} parent=1 // pred_check
      _
    $region23: #{_lambda_.1} parent=1 // pred_check_branch
      %52 = sbr.rel (0) target = $region25
    $region24: #{_lambda_.1} parent=1 // pred_region
      %53 = dma.done [#allocation6], 256
    $region25: #{_lambda_.1} parent=1 // pred_fallthru
      _
    // Predicated region
    $region26: #{_lambda_.1} parent=1 // pred_check
      _
    $region27: #{_lambda_.1} parent=1 // pred_check_branch
      %55 = sbr.rel (0) target = $region29
    $region28: #{_lambda_.1} parent=1 // pred_region
      %56 = dma.done [#allocation6], 512
    $region29: #{_lambda_.1} parent=1 // pred_fallthru
      _
    %v58 = vld [vmem:[%s3] sm:$0x3]
    %v59 = vld [vmem:[#allocation2] sm:$0xff]
    %v60 = vpack.c.bf16 %v59, %v59
    %v61 = vld [vmem:[#allocation5] sm:$0xf]
    %v62 = vld [vmem:[#allocation5 + $0x4] sm:$0xf]
    %v63 = vld [vmem:[#allocation5 + $0x8] sm:$0xf]
    %v64 = vld [vmem:[#allocation5 + $0xc] sm:$0xf]
    %v65 = vlaneseq
    %v66 = vshrl.u32 %v65, 7
    %v67 = vsub.s32 0, %v66
    %v68 = vrot.slane %v58, %v67
    %v73 = vunpack.c.l.b16 %v61
    %v74 = vunpack.c.l.b16 %v62
    %v75 = vunpack.c.l.b16 %v63
    %v76 = vunpack.c.l.b16 %v64
    %v77 = vpack.c.b16 %v74, %v73
    %v78 = vpack.c.b16 %v76, %v75
    %vm81 = vcmask 261120
    %v83 = vsel %vm81, %v60, 0
    %85 = vmatprep.subr.bf16.mxu0 0
    %86 = vmatpush1.bf16.msra.mxu0 %v77
    %87 = vmatprep.subr.bf16.mxu0 0
    %88 = vmatpush1.bf16.msra.mxu0 %v78
    %89 = vmatprep.subr.bf16.mxu0 0
    %90 = vmatpush1.bf16.msra.mxu0 0
    %91 = vmatprep.subr.bf16.mxu0 0
    %92 = vmatpush1.bf16.msra.mxu0 0
    %93 = vmatprep.subr.bf16.mxu0 0
    %94 = vmatpush1.bf16.msra.mxu0 0
    %95 = vmatprep.subr.bf16.mxu0 0
    %96 = vmatpush1.bf16.msra.mxu0 0
    %97 = vmatprep.subr.bf16.mxu0 0
    %98 = vmatpush1.bf16.msra.mxu0 0
    %99 = vmatprep.subr.bf16.mxu0 0
    %100 = vmatpush1.bf16.msra.mxu0 0
    %101 = vmatprep.subr.bf16.mxu0 0
    %102 = vmatpush1.bf16.msra.mxu0 0
    %103 = vmatprep.subr.bf16.mxu0 0
    %104 = vmatpush1.bf16.msra.mxu0 0
    %105 = vmatprep.subr.bf16.mxu0 0
    %106 = vmatpush1.bf16.msra.mxu0 0
    %107 = vmatprep.subr.bf16.mxu0 0
    %108 = vmatpush1.bf16.msra.mxu0 0
    %109 = vmatprep.subr.bf16.mxu0 0
    %110 = vmatpush1.bf16.msra.mxu0 0
    %111 = vmatprep.subr.bf16.mxu0 0
    %112 = vmatpush1.bf16.msra.mxu0 0
    %113 = vmatprep.subr.bf16.mxu0 0
    %114 = vmatpush1.bf16.msra.mxu0 0
    %115 = vmatprep.subr.bf16.mxu0 0
    %116 = vmatpush1.bf16.msra.mxu0 0
    %117 = vmatprep.mubr.bf16.mxu0 0
    %118 = vmatmul.mubr.bf16.gmra.mrb[0].mxu0 %v83
    %v119 = vpop.f32.mrb[0].mxu0
    %v120 = vadd.f32 %v68, %v119
    %v121 = vpop.f32.mrb[0].mxu0
    %v122 = vpop.f32.mrb[0].mxu0
    %v123 = vpop.f32.mrb[0].mxu0
    %124 = vdwg.mxu0
    %v125 = vpack.c.bf16 %v120, %v120
    %v126 = vld [vmem:[#allocation7] sm:$0xf]
    %v127 = vld [vmem:[#allocation7 + $0x4] sm:$0xf]
    %v128 = vld [vmem:[#allocation7 + $0x8] sm:$0xf]
    %v129 = vld [vmem:[#allocation7 + $0xc] sm:$0xf]
    %v130 = vld [vmem:[#allocation7 + $0x10] sm:$0xf]
    %v131 = vld [vmem:[#allocation7 + $0x14] sm:$0xf]
    %v132 = vld [vmem:[#allocation7 + $0x18] sm:$0xf]
    %v133 = vld [vmem:[#allocation7 + $0x1c] sm:$0xf]
    %v134 = vlaneseq
    %v135 = vshrl.u32 %v134, 7
    %v136 = vsub.s32 1, %v135
    %v137 = vrot.slane %v58, %v136
    %v146 = vunpack.c.l.b16 %v126
    %v147 = vunpack.c.l.b16 %v127
    %v148 = vunpack.c.l.b16 %v128
    %v149 = vunpack.c.l.b16 %v129
    %v150 = vunpack.c.l.b16 %v130
    %v151 = vunpack.c.l.b16 %v131
    %v152 = vunpack.c.l.b16 %v132
    %v153 = vunpack.c.l.b16 %v133
    %v154 = vpack.c.b16 %v147, %v146
    %v155 = vpack.c.b16 %v149, %v148
    %v156 = vpack.c.b16 %v151, %v150
    %v157 = vpack.c.b16 %v153, %v152
    %vm162 = vcmask 523264
    %v164 = vsel %vm162, %v125, 0
    %166 = vmatprep.subr.bf16.mxu0 0
    %167 = vmatpush1.bf16.msra.mxu0 %v154
    %168 = vmatprep.subr.bf16.mxu0 0
    %169 = vmatpush1.bf16.msra.mxu0 %v155
    %170 = vmatprep.subr.bf16.mxu0 0
    %171 = vmatpush1.bf16.msra.mxu0 %v156
    %172 = vmatprep.subr.bf16.mxu0 0
    %173 = vmatpush1.bf16.msra.mxu0 %v157
    %174 = vmatprep.subr.bf16.mxu0 0
    %175 = vmatpush1.bf16.msra.mxu0 0
    %176 = vmatprep.subr.bf16.mxu0 0
    %177 = vmatpush1.bf16.msra.mxu0 0
    %178 = vmatprep.subr.bf16.mxu0 0
    %179 = vmatpush1.bf16.msra.mxu0 0
    %180 = vmatprep.subr.bf16.mxu0 0
    %181 = vmatpush1.bf16.msra.mxu0 0
    %182 = vmatprep.subr.bf16.mxu0 0
    %183 = vmatpush1.bf16.msra.mxu0 0
    %184 = vmatprep.subr.bf16.mxu0 0
    %185 = vmatpush1.bf16.msra.mxu0 0
    %186 = vmatprep.subr.bf16.mxu0 0
    %187 = vmatpush1.bf16.msra.mxu0 0
    %188 = vmatprep.subr.bf16.mxu0 0
    %189 = vmatpush1.bf16.msra.mxu0 0
    %190 = vmatprep.subr.bf16.mxu0 0
    %191 = vmatpush1.bf16.msra.mxu0 0
    %192 = vmatprep.subr.bf16.mxu0 0
    %193 = vmatpush1.bf16.msra.mxu0 0
    %194 = vmatprep.subr.bf16.mxu0 0
    %195 = vmatpush1.bf16.msra.mxu0 0
    %196 = vmatprep.subr.bf16.mxu0 0
    %197 = vmatpush1.bf16.msra.mxu0 0
    %198 = vmatprep.mubr.bf16.mxu0 0
    %199 = vmatmul.mubr.bf16.gmra.mrb[0].mxu0 %v164
    %v200 = vpop.f32.mrb[0].mxu0
    %v201 = vadd.f32 %v137, %v200
    %v202 = vpop.f32.mrb[0].mxu0
    %v203 = vpop.f32.mrb[0].mxu0
    %v204 = vpop.f32.mrb[0].mxu0
    %205 = vdwg.mxu0
    %206 = vst [vmem:[#allocation8] sm:$0xff] %v201
    // Predicated region
    $region30: #{_lambda_.1} parent=1 // pred_check
      _
    $region31: #{_lambda_.1} parent=1 // pred_check_branch
      %208 = sbr.rel (0) target = $region33
    $region32: #{_lambda_.1} parent=1 // pred_region
      %s210 = ssub.s32 128, 128
      %211 = vsyncadd [#allocation4], %s210
      %s213 = sshll.u32 [#allocation8], 4
      %s214 = int_to_ptr.vmem [resolvable:$true] %s213
      %216 = dma.vmem_to_hbm [thread:$0]  %s214, 128, %s4, [#allocation4]
    $region33: #{_lambda_.1} parent=1 // pred_fallthru
      _
    // Predicated region
    $region34: #{_lambda_.1} parent=1 // pred_check
      _
    $region35: #{_lambda_.1} parent=1 // pred_check_branch
      %218 = sbr.rel (0) target = $region37
    $region36: #{_lambda_.1} parent=1 // pred_region
      %219 = dma.done [#allocation4], 128
    $region37: #{_lambda_.1} parent=1 // pred_fallthru
      _
    %220 = vsyncpa [#allocation3], 1
    %221 = vsyncpa [#allocation6], 1
    %222 = vsyncpa [#allocation4], 1

</llo_original>
